<compile_context>
chip_gen: v6e
topology: v6e:2x2x1
jax: 0.10.0
libtpu: 0.0.40
codegen_flags: <defaults>
</compile_context>

<pallas_src>
import math
import jax
import jax.numpy as jnp
from jax.experimental import pallas as pl
from jax.experimental.pallas import tpu as pltpu

_LANE = 128               # TPU lane width (padded output width for small B).
_MAX_TILE = 1024          # MXU-friendly batch tile (multiple of 256).
_LANE_DENSE_MAX_B = 65536 # above this, padded writeback dominates -> 1-wide.


def _mlp_kernel(x_ref, w1_ref, b1_ref, w2_ref, b2_ref, w3_ref, b3_ref,
                w4_ref, b4_ref, o_ref):
    # ---- Layer 1: K = input_size (4) -> VPU broadcast FMAs in f32. --------
    x = x_ref[...]                                   # (tb, in) f32
    h = None
    for k in range(x_ref.shape[1]):                  # static, tiny loop (4)
        term = x[:, k:k + 1] * w1_ref[k:k + 1, :]    # (tb,1)*(1,H) -> (tb,H)
        h = term if h is None else h + term
    h = jnp.maximum(h + b1_ref[...], 0.0).astype(jnp.bfloat16)

    # ---- Layers 2-3: bf16 MXU matmuls, f32 accumulate, bias+ReLU on VPU. --
    h = jnp.dot(h, w2_ref[...], preferred_element_type=jnp.float32)
    h = jnp.maximum(h + b2_ref[...], 0.0).astype(jnp.bfloat16)

    h = jnp.dot(h, w3_ref[...], preferred_element_type=jnp.float32)
    h = jnp.maximum(h + b3_ref[...], 0.0).astype(jnp.bfloat16)

    # ---- Layer 4: width is 128 (lane-dense padded) or 1 (true width). -----
    out = jnp.dot(h, w4_ref[...], preferred_element_type=jnp.float32) + b4_ref[...]
    o_ref[...] = out.astype(o_ref.dtype)


def prepare_params(params):
    """One-time conversion of f32 torch-style params into kernel-ready form.

    Hoists all casts / padding out of the per-call hot path (important for RL
    rollout loops that call the forward every step).
    """
    hidden, out_size = params["w4"].shape
    w4 = params["w4"].astype(jnp.bfloat16)
    b4 = params["b4"].reshape(1, -1).astype(jnp.float32)
    pad = max(out_size, _LANE)
    w4_padded = jnp.zeros((hidden, pad), jnp.bfloat16).at[:, :out_size].set(w4)
    b4_padded = jnp.zeros((1, pad), jnp.float32).at[:, :out_size].set(b4)
    return {
        # Layer 1 runs on the VPU in f32.
        "w1": params["w1"].astype(jnp.float32),
        "b1": params["b1"].reshape(1, -1).astype(jnp.float32),
        # Layers 2-4: bf16 weights (MXU), f32 biases (added to f32 acc).
        "w2": params["w2"].astype(jnp.bfloat16),
        "b2": params["b2"].reshape(1, -1).astype(jnp.float32),
        "w3": params["w3"].astype(jnp.bfloat16),
        "b3": params["b3"].reshape(1, -1).astype(jnp.float32),
        "w4_narrow": w4, "b4_narrow": b4,          # true-width output path
        "w4_padded": w4_padded, "b4_padded": b4_padded,  # lane-dense path
    }


def simple_qnet_forward(x, prepped, *, batch_tile=None, lane_dense=None):
    """x: (B, input_size) float32.  prepped: output of prepare_params."""
    B, in_size = x.shape
    hidden = prepped["w2"].shape[0]
    out_size = prepped["w4_narrow"].shape[1]

    # --- output-width choice: lane-dense pad for small B, true width for big B
    if lane_dense is None:
        lane_dense = B <= _LANE_DENSE_MAX_B
    if lane_dense:
        w4, b4 = prepped["w4_padded"], prepped["b4_padded"]
    else:
        w4, b4 = prepped["w4_narrow"], prepped["b4_narrow"]
    out_width = w4.shape[1]

    # --- batch tiling: single grid step when it fits, else 1024-row tiles
    if batch_tile is not None:
        tb = int(batch_tile)
        assert tb == B or tb % 8 == 0, (
            f"batch_tile={tb} must equal B={B} or be a multiple of 8")
        Bp = -(-B // tb) * tb
    elif B <= _MAX_TILE:
        tb, Bp = B, B                       # one step; block == full array dims
    else:
        tb = _MAX_TILE                      # MXU-shaped (multiple of 256)
        Bp = -(-B // tb) * tb               # pad batch up, keep tiles fat
    steps = Bp // tb
    # TODO(synk): on v7x, round `steps` up to a multiple of 2 (or use
    # CORE_PARALLEL / core_map) so both TensorCores get equal work.

    xp = x if Bp == B else jnp.pad(x, ((0, Bp - B), (0, 0)))

    w1, b1 = prepped["w1"], prepped["b1"]
    w2, b2 = prepped["w2"], prepped["b2"]
    w3, b3 = prepped["w3"], prepped["b3"]

    def batch_spec(cols):
        return pl.BlockSpec((tb, cols), lambda i: (i, 0))

    def full_spec(rows, cols):
        return pl.BlockSpec((rows, cols), lambda i: (0, 0))  # grid-invariant

    flops = 2 * Bp * (in_size * hidden + 2 * hidden * hidden + hidden * out_width)
    param_bytes = sum(int(a.size) * a.dtype.itemsize
                      for a in (w1, b1, w2, b2, w3, b3, w4, b4))
    bytes_accessed = int(xp.size) * 4 + param_bytes + Bp * out_width * 4
    cost = pl.CostEstimate(flops=flops, transcendentals=0,
                           bytes_accessed=bytes_accessed)

    out = pl.pallas_call(
        _mlp_kernel,
        out_shape=jax.ShapeDtypeStruct((Bp, out_width), jnp.float32),
        grid_spec=pltpu.PrefetchScalarGridSpec(
            num_scalar_prefetch=0,
            grid=(steps,),
            in_specs=[
                batch_spec(in_size),           # x tile  (tb, in)   f32
                full_spec(in_size, hidden),    # w1                 f32
                full_spec(1, hidden),          # b1                 f32
                full_spec(hidden, hidden),     # w2                 bf16
                full_spec(1, hidden),          # b2                 f32
                full_spec(hidden, hidden),     # w3                 bf16
                full_spec(1, hidden),          # b3                 f32
                full_spec(hidden, out_width),  # w4 (padded/narrow) bf16
                full_spec(1, out_width),       # b4                 f32
            ],
            out_specs=batch_spec(out_width),
        ),
        compiler_params=pltpu.CompilerParams(
            dimension_semantics=("parallel",) if steps > 1 else ("arbitrary",)),
        cost_estimate=cost,
    )(xp, w1, b1, w2, b2, w3, b3, w4, b4)

    if lane_dense and out_width != out_size:
        out = out[:, :out_size]
    if Bp != B:
        out = out[:B]
    return out


def init_params(key, input_size=4, hidden_size=256):
    """Deterministic init mimicking torch nn.Linear default (U[-1/sqrt(fan_in), ..])."""
    dims = [(input_size, hidden_size),
            (hidden_size, hidden_size),
            (hidden_size, hidden_size),
            (hidden_size, 1)]
    params = {}
    for i, (fan_in, fan_out) in enumerate(dims, start=1):
        key, kw, kb = jax.random.split(key, 3)
        bound = 1.0 / math.sqrt(fan_in)
        params[f"w{i}"] = jax.random.uniform(
            kw, (fan_in, fan_out), jnp.float32, -bound, bound)
        params[f"b{i}"] = jax.random.uniform(
            kb, (1, fan_out), jnp.float32, -bound, bound)
    return params


def reference_forward(x, params):
    """Mirrors the kernel numerics: layer 1 in f32, layers 2-4 bf16 operands
    with f32 accumulation."""
    def dot32(a, w):
        return jnp.dot(a.astype(jnp.bfloat16), w.astype(jnp.bfloat16),
                       preferred_element_type=jnp.float32)
    h = jnp.maximum(jnp.dot(x, params["w1"]) + params["b1"], 0.0)
    h = jnp.maximum(dot32(h, params["w2"]) + params["b2"], 0.0)
    h = jnp.maximum(dot32(h, params["w3"]) + params["b3"], 0.0)
    return dot32(h, params["w4"]) + params["b4"]


if __name__ == "__main__":
    key = jax.random.PRNGKey(0)
    key, kx = jax.random.split(key)

    B, INPUT_SIZE, HIDDEN = 8, 4, 256
    x = jax.random.normal(kx, (B, INPUT_SIZE), jnp.float32)
    params = init_params(key, INPUT_SIZE, HIDDEN)

    prepped = prepare_params(params)   # one-time prep, out of the hot path
    out = simple_qnet_forward(x, prepped)
    out = jax.block_until_ready(out)

    ref = reference_forward(x, params)
    assert out.shape == (B, 1), out.shape
    assert jnp.allclose(out, ref, atol=2e-2, rtol=2e-2), (out, ref)

    print("KERNEL_OK")
</pallas_src>

<mosaic_0001>
module attributes {stable_mosaic.version = 11 : i64} {
  func.func @_mlp_kernel(%arg0: i32, %arg1: memref<8x4xf32, #tpu.memory_space<vmem>>, %arg2: memref<4x256xf32, #tpu.memory_space<vmem>>, %arg3: memref<1x256xf32, #tpu.memory_space<vmem>>, %arg4: memref<256x256xbf16, #tpu.memory_space<vmem>>, %arg5: memref<1x256xf32, #tpu.memory_space<vmem>>, %arg6: memref<256x256xbf16, #tpu.memory_space<vmem>>, %arg7: memref<1x256xf32, #tpu.memory_space<vmem>>, %arg8: memref<256x128xbf16, #tpu.memory_space<vmem>>, %arg9: memref<1x128xf32, #tpu.memory_space<vmem>>, %arg10: memref<8x128xf32, #tpu.memory_space<vmem>>) attributes {dimension_semantics = [#tpu.dimension_semantics<arbitrary>], iteration_bounds = array<i64: 1>, scalar_prefetch = 0 : i64, scratch_operands = 0 : i64, tpu.core_type = #tpu.core_type<tc>, window_params = [{transform_indices = @transform_0, window_bounds = array<i64: 8, 4>}, {pipeline_mode = #tpu.pipeline_mode<synchronous>, transform_indices = @transform_1, window_bounds = array<i64: 4, 256>}, {pipeline_mode = #tpu.pipeline_mode<synchronous>, transform_indices = @transform_2, window_bounds = array<i64: 1, 256>}, {pipeline_mode = #tpu.pipeline_mode<synchronous>, transform_indices = @transform_3, window_bounds = array<i64: 256, 256>}, {pipeline_mode = #tpu.pipeline_mode<synchronous>, transform_indices = @transform_4, window_bounds = array<i64: 1, 256>}, {pipeline_mode = #tpu.pipeline_mode<synchronous>, transform_indices = @transform_5, window_bounds = array<i64: 256, 256>}, {pipeline_mode = #tpu.pipeline_mode<synchronous>, transform_indices = @transform_6, window_bounds = array<i64: 1, 256>}, {pipeline_mode = #tpu.pipeline_mode<synchronous>, transform_indices = @transform_7, window_bounds = array<i64: 256, 128>}, {pipeline_mode = #tpu.pipeline_mode<synchronous>, transform_indices = @transform_8, window_bounds = array<i64: 1, 128>}, {transform_indices = @transform_9, window_bounds = array<i64: 8, 128>}]} {
    %c0 = arith.constant 0 : index
    %c0_0 = arith.constant 0 : index
    %0 = vector.load %arg1[%c0, %c0_0] : memref<8x4xf32, #tpu.memory_space<vmem>>, vector<8x4xf32>
    %1 = vector.extract_strided_slice %0 {offsets = [0, 0], sizes = [8, 1], strides = [1, 1]} : vector<8x4xf32> to vector<8x1xf32>
    %c0_1 = arith.constant 0 : index
    %c0_2 = arith.constant 0 : index
    %2 = vector.load %arg2[%c0_1, %c0_2] : memref<4x256xf32, #tpu.memory_space<vmem>>, vector<1x256xf32>
    %3 = vector.broadcast %1 : vector<8x1xf32> to vector<8x256xf32>
    %4 = vector.broadcast %2 : vector<1x256xf32> to vector<8x256xf32>
    %5 = arith.mulf %3, %4 : vector<8x256xf32>
    %6 = vector.extract_strided_slice %0 {offsets = [0, 1], sizes = [8, 1], strides = [1, 1]} : vector<8x4xf32> to vector<8x1xf32>
    %c1 = arith.constant 1 : index
    %c0_3 = arith.constant 0 : index
    %7 = vector.load %arg2[%c1, %c0_3] : memref<4x256xf32, #tpu.memory_space<vmem>>, vector<1x256xf32>
    %8 = vector.broadcast %6 : vector<8x1xf32> to vector<8x256xf32>
    %9 = vector.broadcast %7 : vector<1x256xf32> to vector<8x256xf32>
    %10 = arith.mulf %8, %9 : vector<8x256xf32>
    %11 = arith.addf %5, %10 : vector<8x256xf32>
    %12 = vector.extract_strided_slice %0 {offsets = [0, 2], sizes = [8, 1], strides = [1, 1]} : vector<8x4xf32> to vector<8x1xf32>
    %c2 = arith.constant 2 : index
    %c0_4 = arith.constant 0 : index
    %13 = vector.load %arg2[%c2, %c0_4] : memref<4x256xf32, #tpu.memory_space<vmem>>, vector<1x256xf32>
    %14 = vector.broadcast %12 : vector<8x1xf32> to vector<8x256xf32>
    %15 = vector.broadcast %13 : vector<1x256xf32> to vector<8x256xf32>
    %16 = arith.mulf %14, %15 : vector<8x256xf32>
    %17 = arith.addf %11, %16 : vector<8x256xf32>
    %18 = vector.extract_strided_slice %0 {offsets = [0, 3], sizes = [8, 1], strides = [1, 1]} : vector<8x4xf32> to vector<8x1xf32>
    %c3 = arith.constant 3 : index
    %c0_5 = arith.constant 0 : index
    %19 = vector.load %arg2[%c3, %c0_5] : memref<4x256xf32, #tpu.memory_space<vmem>>, vector<1x256xf32>
    %20 = vector.broadcast %18 : vector<8x1xf32> to vector<8x256xf32>
    %21 = vector.broadcast %19 : vector<1x256xf32> to vector<8x256xf32>
    %22 = arith.mulf %20, %21 : vector<8x256xf32>
    %23 = arith.addf %17, %22 : vector<8x256xf32>
    %c0_6 = arith.constant 0 : index
    %c0_7 = arith.constant 0 : index
    %24 = vector.load %arg3[%c0_6, %c0_7] : memref<1x256xf32, #tpu.memory_space<vmem>>, vector<1x256xf32>
    %25 = vector.broadcast %24 : vector<1x256xf32> to vector<8x256xf32>
    %26 = arith.addf %23, %25 : vector<8x256xf32>
    %cst = arith.constant 0.000000e+00 : f32
    %27 = vector.broadcast %cst : f32 to vector<8x256xf32>
    %28 = arith.maximumf %26, %27 : vector<8x256xf32>
    %29 = arith.truncf %28 : vector<8x256xf32> to vector<8x256xbf16>
    %c0_8 = arith.constant 0 : index
    %c0_9 = arith.constant 0 : index
    %30 = vector.load %arg4[%c0_8, %c0_9] : memref<256x256xbf16, #tpu.memory_space<vmem>>, vector<256x256xbf16>
    %cst_10 = arith.constant dense<0.000000e+00> : vector<8x256xf32>
    %31 = tpu.matmul %29, %30, %cst_10 {dimension_numbers = #tpu.dot_dimension_numbers<[1], [0], [0], [1], [0, 0, 1, 1], [], []>} : vector<8x256xbf16>, vector<256x256xbf16>, vector<8x256xf32> -> vector<8x256xf32>
    %c0_11 = arith.constant 0 : index
    %c0_12 = arith.constant 0 : index
    %32 = vector.load %arg5[%c0_11, %c0_12] : memref<1x256xf32, #tpu.memory_space<vmem>>, vector<1x256xf32>
    %33 = vector.broadcast %32 : vector<1x256xf32> to vector<8x256xf32>
    %34 = arith.addf %31, %33 : vector<8x256xf32>
    %cst_13 = arith.constant 0.000000e+00 : f32
    %35 = vector.broadcast %cst_13 : f32 to vector<8x256xf32>
    %36 = arith.maximumf %34, %35 : vector<8x256xf32>
    %37 = arith.truncf %36 : vector<8x256xf32> to vector<8x256xbf16>
    %c0_14 = arith.constant 0 : index
    %c0_15 = arith.constant 0 : index
    %38 = vector.load %arg6[%c0_14, %c0_15] : memref<256x256xbf16, #tpu.memory_space<vmem>>, vector<256x256xbf16>
    %cst_16 = arith.constant dense<0.000000e+00> : vector<8x256xf32>
    %39 = tpu.matmul %37, %38, %cst_16 {dimension_numbers = #tpu.dot_dimension_numbers<[1], [0], [0], [1], [0, 0, 1, 1], [], []>} : vector<8x256xbf16>, vector<256x256xbf16>, vector<8x256xf32> -> vector<8x256xf32>
    %c0_17 = arith.constant 0 : index
    %c0_18 = arith.constant 0 : index
    %40 = vector.load %arg7[%c0_17, %c0_18] : memref<1x256xf32, #tpu.memory_space<vmem>>, vector<1x256xf32>
    %41 = vector.broadcast %40 : vector<1x256xf32> to vector<8x256xf32>
    %42 = arith.addf %39, %41 : vector<8x256xf32>
    %cst_19 = arith.constant 0.000000e+00 : f32
    %43 = vector.broadcast %cst_19 : f32 to vector<8x256xf32>
    %44 = arith.maximumf %42, %43 : vector<8x256xf32>
    %45 = arith.truncf %44 : vector<8x256xf32> to vector<8x256xbf16>
    %c0_20 = arith.constant 0 : index
    %c0_21 = arith.constant 0 : index
    %46 = vector.load %arg8[%c0_20, %c0_21] : memref<256x128xbf16, #tpu.memory_space<vmem>>, vector<256x128xbf16>
    %cst_22 = arith.constant dense<0.000000e+00> : vector<8x128xf32>
    %47 = tpu.matmul %45, %46, %cst_22 {dimension_numbers = #tpu.dot_dimension_numbers<[1], [0], [0], [1], [0, 0, 1, 1], [], []>} : vector<8x256xbf16>, vector<256x128xbf16>, vector<8x128xf32> -> vector<8x128xf32>
    %c0_23 = arith.constant 0 : index
    %c0_24 = arith.constant 0 : index
    %48 = vector.load %arg9[%c0_23, %c0_24] : memref<1x128xf32, #tpu.memory_space<vmem>>, vector<1x128xf32>
    %49 = vector.broadcast %48 : vector<1x128xf32> to vector<8x128xf32>
    %50 = arith.addf %47, %49 : vector<8x128xf32>
    %c0_25 = arith.constant 0 : index
    %c0_26 = arith.constant 0 : index
    %51 = vector.load %arg10[%c0_25, %c0_26] : memref<8x128xf32, #tpu.memory_space<vmem>>, vector<8x128xf32>
    tpu.vector_store %arg10[%c0_25, %c0_26], %50 {strides = array<i32>} : memref<8x128xf32, #tpu.memory_space<vmem>>, vector<8x128xf32>,
    return
  }
  func.func @transform_0(%arg0: i32) -> (i32, i32) {
    %c0_i32 = arith.constant 0 : i32
    %c0_i32_0 = arith.constant 0 : i32
    return %arg0, %c0_i32 : i32, i32
  }
  func.func @transform_1(%arg0: i32) -> (i32, i32) {
    %c0_i32 = arith.constant 0 : i32
    %c0_i32_0 = arith.constant 0 : i32
    %c0_i32_1 = arith.constant 0 : i32
    return %c0_i32, %c0_i32_0 : i32, i32
  }
  func.func @transform_2(%arg0: i32) -> (i32, i32) {
    %c0_i32 = arith.constant 0 : i32
    %c0_i32_0 = arith.constant 0 : i32
    %c0_i32_1 = arith.constant 0 : i32
    return %c0_i32, %c0_i32_0 : i32, i32
  }
  func.func @transform_3(%arg0: i32) -> (i32, i32) {
    %c0_i32 = arith.constant 0 : i32
    %c0_i32_0 = arith.constant 0 : i32
    %c0_i32_1 = arith.constant 0 : i32
    return %c0_i32, %c0_i32_0 : i32, i32
  }
  func.func @transform_4(%arg0: i32) -> (i32, i32) {
    %c0_i32 = arith.constant 0 : i32
    %c0_i32_0 = arith.constant 0 : i32
    %c0_i32_1 = arith.constant 0 : i32
    return %c0_i32, %c0_i32_0 : i32, i32
  }
  func.func @transform_5(%arg0: i32) -> (i32, i32) {
    %c0_i32 = arith.constant 0 : i32
    %c0_i32_0 = arith.constant 0 : i32
    %c0_i32_1 = arith.constant 0 : i32
    return %c0_i32, %c0_i32_0 : i32, i32
  }
  func.func @transform_6(%arg0: i32) -> (i32, i32) {
    %c0_i32 = arith.constant 0 : i32
    %c0_i32_0 = arith.constant 0 : i32
    %c0_i32_1 = arith.constant 0 : i32
    return %c0_i32, %c0_i32_0 : i32, i32
  }
  func.func @transform_7(%arg0: i32) -> (i32, i32) {
    %c0_i32 = arith.constant 0 : i32
    %c0_i32_0 = arith.constant 0 : i32
    %c0_i32_1 = arith.constant 0 : i32
    return %c0_i32, %c0_i32_0 : i32, i32
  }
  func.func @transform_8(%arg0: i32) -> (i32, i32) {
    %c0_i32 = arith.constant 0 : i32
    %c0_i32_0 = arith.constant 0 : i32
    %c0_i32_1 = arith.constant 0 : i32
    return %c0_i32, %c0_i32_0 : i32, i32
  }
  func.func @transform_9(%arg0: i32) -> (i32, i32) {
    %c0_i32 = arith.constant 0 : i32
    %c0_i32_0 = arith.constant 0 : i32
    return %arg0, %c0_i32 : i32, i32
  }
}

</mosaic_0001>

<llo_original>
// kernel: tpu_custom_call.1
$region0: #{tpu_custom_call.1}
  #allocation0 [shape = 'u32[]', space=smem, size = 0x4, offset = 0x4, fixed_abs, tag = 'smem constant byte address 0x4 - core index']
  #allocation1 [shape = 'u32[144,128]{1,0:T(1,128)}', space=vmem, size = 0x12000, scoped, tag = 'internal scratch']
  %s0 = inlined_call_operand.vmem [shape: f32[8,4], index: 0, kind: input, shape index: {}]
  %s1 = inlined_call_operand.vmem [shape: f32[4,256], index: 1, kind: input, shape index: {}]
  %s2 = inlined_call_operand.vmem [shape: f32[1,256], index: 2, kind: input, shape index: {}]
  %s3 = inlined_call_operand.hbm [shape: bf16[256,256], index: 3, kind: input, shape index: {}]
  %s4 = inlined_call_operand.vmem [shape: f32[1,256], index: 4, kind: input, shape index: {}]
  %s5 = inlined_call_operand.hbm [shape: bf16[256,256], index: 5, kind: input, shape index: {}]
  %s6 = inlined_call_operand.vmem [shape: f32[1,256], index: 6, kind: input, shape index: {}]
  %s7 = inlined_call_operand.hbm [shape: bf16[256,128], index: 7, kind: input, shape index: {}]
  %s8 = inlined_call_operand.vmem [shape: f32[1,128], index: 8, kind: input, shape index: {}]
  %s9 = inlined_call_operand.hbm [shape: f32[8,128], index: 9, kind: output, shape index: {}]
  %s10 = sld [smem:[#allocation0]]
  $region58: #{tpu_custom_call.1} parent=0
    _
  %s12 = ssub.s32 1, %s10
  %s13 = scalar_select 0, %s12, %s10
  $region1: #{tpu_custom_call.1} parent=0
    #allocation2 [shape = 'u8[131072]{0}', space=vmem, size = 0x20000, scoped, tag = 'input window, operand 3, single buffered']
    #allocation3 [shape = 's32[1]{0}', space=sflag, size = 0x4, scoped, tag = 'scoped memory for tpu_custom_call.1']
    #allocation4 [shape = 's32[1]{0}', space=sflag, size = 0x4, scoped, tag = 'scoped memory for tpu_custom_call.1']
    #allocation5 [shape = 'u8[131072]{0}', space=vmem, size = 0x20000, scoped, tag = 'input window, operand 5, single buffered']
    #allocation6 [shape = 's32[1]{0}', space=sflag, size = 0x4, scoped, tag = 'scoped memory for tpu_custom_call.1']
    #allocation7 [shape = 'u8[65536]{0}', space=vmem, size = 0x10000, scoped, tag = 'input window, operand 7, single buffered']
    #allocation8 [shape = 'u8[4096]{0}', space=vmem, size = 0x1000, scoped, tag = 'output window, operand 0, single buffered']
    %14 = vsyncpa [#allocation3], 0
    %15 = vsyncpa [#allocation6], 0
    %16 = vsyncpa [#allocation4], 0
    // Predicated region
    $region2: #{tpu_custom_call.1} parent=1 // pred_check
      _
    $region3: #{tpu_custom_call.1} parent=1 // pred_check_branch
      %18 = sbr.rel (0) target = $region5
    $region4: #{tpu_custom_call.1} parent=1 // pred_region
      _
    $region5: #{tpu_custom_call.1} parent=1 // pred_fallthru
      _
    // Predicated region
    $region6: #{tpu_custom_call.1} parent=1 // pred_check
      _
    $region7: #{tpu_custom_call.1} parent=1 // pred_check_branch
      %20 = sbr.rel (0) target = $region9
    $region8: #{tpu_custom_call.1} parent=1 // pred_region
      _
    $region9: #{tpu_custom_call.1} parent=1 // pred_fallthru
      _
    // Predicated region
    $region10: #{tpu_custom_call.1} parent=1 // pred_check
      _
    $region11: #{tpu_custom_call.1} parent=1 // pred_check_branch
      %22 = sbr.rel (0) target = $region13
    $region12: #{tpu_custom_call.1} parent=1 // pred_region
      _
    $region13: #{tpu_custom_call.1} parent=1 // pred_fallthru
      _
    // Predicated region
    $region14: #{tpu_custom_call.1} parent=1 // pred_check
      _
    $region15: #{tpu_custom_call.1} parent=1 // pred_check_branch
      %24 = sbr.rel (0) target = $region17
    $region16: #{tpu_custom_call.1} parent=1 // pred_region
      %s26 = ssub.s32 4096, 4096
      %27 = vsyncadd [#allocation3], %s26
      %s28 = sshll.u32 [#allocation2], 4
      %s29 = int_to_ptr.vmem [resolvable:$true] %s28
      %34 = dma.hbm_to_vmem [thread:$0]  %s3, 4096, %s29, [#allocation3], 128, 128, 8
    $region17: #{tpu_custom_call.1} parent=1 // pred_fallthru
      _
    // Predicated region
    $region18: #{tpu_custom_call.1} parent=1 // pred_check
      _
    $region19: #{tpu_custom_call.1} parent=1 // pred_check_branch
      %36 = sbr.rel (0) target = $region21
    $region20: #{tpu_custom_call.1} parent=1 // pred_region
      _
    $region21: #{tpu_custom_call.1} parent=1 // pred_fallthru
      _
    // Predicated region
    $region22: #{tpu_custom_call.1} parent=1 // pred_check
      _
    $region23: #{tpu_custom_call.1} parent=1 // pred_check_branch
      %38 = sbr.rel (0) target = $region25
    $region24: #{tpu_custom_call.1} parent=1 // pred_region
      %s40 = ssub.s32 4096, 4096
      %41 = vsyncadd [#allocation6], %s40
      %s42 = sshll.u32 [#allocation5], 4
      %s43 = int_to_ptr.vmem [resolvable:$true] %s42
      %48 = dma.hbm_to_vmem [thread:$0]  %s5, 4096, %s43, [#allocation6], 128, 128, 8
    $region25: #{tpu_custom_call.1} parent=1 // pred_fallthru
      _
    // Predicated region
    $region26: #{tpu_custom_call.1} parent=1 // pred_check
      _
    $region27: #{tpu_custom_call.1} parent=1 // pred_check_branch
      %50 = sbr.rel (0) target = $region29
    $region28: #{tpu_custom_call.1} parent=1 // pred_region
      _
    $region29: #{tpu_custom_call.1} parent=1 // pred_fallthru
      _
    // Predicated region
    $region30: #{tpu_custom_call.1} parent=1 // pred_check
      _
    $region31: #{tpu_custom_call.1} parent=1 // pred_check_branch
      %52 = sbr.rel (0) target = $region33
    $region32: #{tpu_custom_call.1} parent=1 // pred_region
      %s54 = ssub.s32 2048, 2048
      %55 = vsyncadd [#allocation6], %s54
      %s56 = sshll.u32 [#allocation7], 4
      %s57 = int_to_ptr.vmem [resolvable:$true] %s56
      %62 = dma.hbm_to_vmem [thread:$0]  %s7, 2048, %s57, [#allocation6], 64, 64, 4
    $region33: #{tpu_custom_call.1} parent=1 // pred_fallthru
      _
    // Predicated region
    $region34: #{tpu_custom_call.1} parent=1 // pred_check
      _
    $region35: #{tpu_custom_call.1} parent=1 // pred_check_branch
      %64 = sbr.rel (0) target = $region37
    $region36: #{tpu_custom_call.1} parent=1 // pred_region
      _
    $region37: #{tpu_custom_call.1} parent=1 // pred_fallthru
      _
    // Predicated region
    $region38: #{tpu_custom_call.1} parent=1 // pred_check
      _
    $region39: #{tpu_custom_call.1} parent=1 // pred_check_branch
      %66 = sbr.rel (0) target = $region41
    $region40: #{tpu_custom_call.1} parent=1 // pred_region
      %67 = dma.done [#allocation3], 4096
    $region41: #{tpu_custom_call.1} parent=1 // pred_fallthru
      _
    // Predicated region
    $region42: #{tpu_custom_call.1} parent=1 // pred_check
      _
    $region43: #{tpu_custom_call.1} parent=1 // pred_check_branch
      %69 = sbr.rel (0) target = $region45
    $region44: #{tpu_custom_call.1} parent=1 // pred_region
      %70 = dma.done [#allocation6], 4096
    $region45: #{tpu_custom_call.1} parent=1 // pred_fallthru
      _
    // Predicated region
    $region46: #{tpu_custom_call.1} parent=1 // pred_check
      _
    $region47: #{tpu_custom_call.1} parent=1 // pred_check_branch
      %72 = sbr.rel (0) target = $region49
    $region48: #{tpu_custom_call.1} parent=1 // pred_region
      %73 = dma.done [#allocation6], 2048
    $region49: #{tpu_custom_call.1} parent=1 // pred_fallthru
      _
    %v75 = vld [vmem:[%s0] sm:$0xff]
    %v76 = vld [vmem:[%s1] ss:$4 sm:$0x3]
    %78 = vset.pattern.permute.xlu0 0
    %79 = vperm.xlu0 %78, %v75
    %v80 = vpop.permute.xlu0 %79
    %v83 = vlaneseq
    %v84 = vshrl.u32 %v83, 7
    %v85 = vsub.s32 0, %v84
    %v86 = vrot.slane %v76, %v85
    %v87 = vlaneseq
    %v88 = vshrl.u32 %v87, 7
    %v89 = vsub.s32 1, %v88
    %v90 = vrot.slane %v76, %v89
    %v93 = vmul.f32 %v80, %v86
    %v94 = vmul.f32 %v80, %v90
    %s95 = scalar_lea.vmem %s1, 1
    %v96 = vld [vmem:[%s95] ss:$4 sm:$0x3]
    %97 = vset.pattern.permute.xlu0 1
    %98 = vperm.xlu0 %97, %v75
    %v99 = vpop.permute.xlu0 %98
    %v102 = vlaneseq
    %v103 = vshrl.u32 %v102, 7
    %v104 = vsub.s32 0, %v103
    %v105 = vrot.slane %v96, %v104
    %v106 = vlaneseq
    %v107 = vshrl.u32 %v106, 7
    %v108 = vsub.s32 1, %v107
    %v109 = vrot.slane %v96, %v108
    %v112 = vmul.f32 %v99, %v105
    %v113 = vmul.f32 %v99, %v109
    %v114 = vadd.f32 %v93, %v112
    %v115 = vadd.f32 %v94, %v113
    %s116 = scalar_lea.vmem %s1, 2
    %v117 = vld [vmem:[%s116] ss:$4 sm:$0x3]
    %118 = vset.pattern.permute.xlu0 2
    %119 = vperm.xlu0 %118, %v75
    %v120 = vpop.permute.xlu0 %119
    %v123 = vlaneseq
    %v124 = vshrl.u32 %v123, 7
    %v125 = vsub.s32 0, %v124
    %v126 = vrot.slane %v117, %v125
    %v127 = vlaneseq
    %v128 = vshrl.u32 %v127, 7
    %v129 = vsub.s32 1, %v128
    %v130 = vrot.slane %v117, %v129
    %v133 = vmul.f32 %v120, %v126
    %v134 = vmul.f32 %v120, %v130
    %v135 = vadd.f32 %v114, %v133
    %v136 = vadd.f32 %v115, %v134
    %s137 = scalar_lea.vmem %s1, 3
    %v138 = vld [vmem:[%s137] ss:$4 sm:$0x3]
    %139 = vset.pattern.permute.xlu0 3
    %140 = vperm.xlu0 %139, %v75
    %v141 = vpop.permute.xlu0 %140
    %v144 = vlaneseq
    %v145 = vshrl.u32 %v144, 7
    %v146 = vsub.s32 0, %v145
    %v147 = vrot.slane %v138, %v146
    %v148 = vlaneseq
    %v149 = vshrl.u32 %v148, 7
    %v150 = vsub.s32 1, %v149
    %v151 = vrot.slane %v138, %v150
    %v154 = vmul.f32 %v141, %v147
    %v155 = vmul.f32 %v141, %v151
    %v156 = vadd.f32 %v135, %v154
    %v157 = vadd.f32 %v136, %v155
    %v158 = vld [vmem:[%s2] sm:$0x3]
    %v160 = vlaneseq
    %v161 = vshrl.u32 %v160, 7
    %v162 = vsub.s32 0, %v161
    %v163 = vrot.slane %v158, %v162
    %v164 = vlaneseq
    %v165 = vshrl.u32 %v164, 7
    %v166 = vsub.s32 1, %v165
    %v167 = vrot.slane %v158, %v166
    %v170 = vadd.f32 %v156, %v163
    %v171 = vadd.f32 %v157, %v167
    %v172 = vmax.f32 %v170, 0.0
    %v173 = vmax.f32 %v171, 0.0
    %v174 = vpack.c.bf16 %v172, %v172
    %v175 = vpack.c.bf16 %v173, %v173
    %v176 = vld [vmem:[#allocation2] sm:$0xff]
    %v177 = vld [vmem:[#allocation2 + $0x8] sm:$0xff]
    %v178 = vld [vmem:[#allocation2 + $0x10] sm:$0xff]
    %v179 = vld [vmem:[#allocation2 + $0x18] sm:$0xff]
    %v180 = vld [vmem:[#allocation2 + $0x20] sm:$0xff]
    %v181 = vld [vmem:[#allocation2 + $0x28] sm:$0xff]
    %v182 = vld [vmem:[#allocation2 + $0x30] sm:$0xff]
    %v183 = vld [vmem:[#allocation2 + $0x38] sm:$0xff]
    %v184 = vld [vmem:[#allocation2 + $0x40] sm:$0xff]
    %v185 = vld [vmem:[#allocation2 + $0x48] sm:$0xff]
    %v186 = vld [vmem:[#allocation2 + $0x50] sm:$0xff]
    %v187 = vld [vmem:[#allocation2 + $0x58] sm:$0xff]
    %v188 = vld [vmem:[#allocation2 + $0x60] sm:$0xff]
    %v189 = vld [vmem:[#allocation2 + $0x68] sm:$0xff]
    %v190 = vld [vmem:[#allocation2 + $0x70] sm:$0xff]
    %v191 = vld [vmem:[#allocation2 + $0x78] sm:$0xff]
    %v192 = vld [vmem:[#allocation2 + $0x80] sm:$0xff]
    %v193 = vld [vmem:[#allocation2 + $0x88] sm:$0xff]
    %v194 = vld [vmem:[#allocation2 + $0x90] sm:$0xff]
    %v195 = vld [vmem:[#allocation2 + $0x98] sm:$0xff]
    %v196 = vld [vmem:[#allocation2 + $0xa0] sm:$0xff]
    %v197 = vld [vmem:[#allocation2 + $0xa8] sm:$0xff]
    %v198 = vld [vmem:[#allocation2 + $0xb0] sm:$0xff]
    %v199 = vld [vmem:[#allocation2 + $0xb8] sm:$0xff]
    %v200 = vld [vmem:[#allocation2 + $0xc0] sm:$0xff]
    %v201 = vld [vmem:[#allocation2 + $0xc8] sm:$0xff]
    %v202 = vld [vmem:[#allocation2 + $0xd0] sm:$0xff]
    %v203 = vld [vmem:[#allocation2 + $0xd8] sm:$0xff]
    %v204 = vld [vmem:[#allocation2 + $0xe0] sm:$0xff]
    %v205 = vld [vmem:[#allocation2 + $0xe8] sm:$0xff]
    %v206 = vld [vmem:[#allocation2 + $0xf0] sm:$0xff]
    %v207 = vld [vmem:[#allocation2 + $0xf8] sm:$0xff]
    %v208 = vld [vmem:[%s4] sm:$0x3]
    %v210 = vlaneseq
    %v211 = vshrl.u32 %v210, 7
    %v212 = vsub.s32 0, %v211
    %v213 = vrot.slane %v208, %v212
    %v214 = vlaneseq
    %v215 = vshrl.u32 %v214, 7
    %v216 = vsub.s32 1, %v215
    %v217 = vrot.slane %v208, %v216
    %v252 = vunpack.c.l.b16 %v176
    %v253 = vunpack.c.h.b16 %v176
    %v254 = vunpack.c.l.b16 %v177
    %v255 = vunpack.c.h.b16 %v177
    %v256 = vunpack.c.l.b16 %v178
    %v257 = vunpack.c.h.b16 %v178
    %v258 = vunpack.c.l.b16 %v179
    %v259 = vunpack.c.h.b16 %v179
    %v260 = vunpack.c.l.b16 %v180
    %v261 = vunpack.c.h.b16 %v180
    %v262 = vunpack.c.l.b16 %v181
    %v263 = vunpack.c.h.b16 %v181
    %v264 = vunpack.c.l.b16 %v182
    %v265 = vunpack.c.h.b16 %v182
    %v266 = vunpack.c.l.b16 %v183
    %v267 = vunpack.c.h.b16 %v183
    %v268 = vunpack.c.l.b16 %v184
    %v269 = vunpack.c.h.b16 %v184
    %v270 = vunpack.c.l.b16 %v185
    %v271 = vunpack.c.h.b16 %v185
    %v272 = vunpack.c.l.b16 %v186
    %v273 = vunpack.c.h.b16 %v186
    %v274 = vunpack.c.l.b16 %v187
    %v275 = vunpack.c.h.b16 %v187
    %v276 = vunpack.c.l.b16 %v188
    %v277 = vunpack.c.h.b16 %v188
    %v278 = vunpack.c.l.b16 %v189
    %v279 = vunpack.c.h.b16 %v189
    %v280 = vunpack.c.l.b16 %v190
    %v281 = vunpack.c.h.b16 %v190
    %v282 = vunpack.c.l.b16 %v191
    %v283 = vunpack.c.h.b16 %v191
    %v284 = vunpack.c.l.b16 %v192
    %v285 = vunpack.c.h.b16 %v192
    %v286 = vunpack.c.l.b16 %v193
    %v287 = vunpack.c.h.b16 %v193
    %v288 = vunpack.c.l.b16 %v194
    %v289 = vunpack.c.h.b16 %v194
    %v290 = vunpack.c.l.b16 %v195
    %v291 = vunpack.c.h.b16 %v195
    %v292 = vunpack.c.l.b16 %v196
    %v293 = vunpack.c.h.b16 %v196
    %v294 = vunpack.c.l.b16 %v197
    %v295 = vunpack.c.h.b16 %v197
    %v296 = vunpack.c.l.b16 %v198
    %v297 = vunpack.c.h.b16 %v198
    %v298 = vunpack.c.l.b16 %v199
    %v299 = vunpack.c.h.b16 %v199
    %v300 = vunpack.c.l.b16 %v200
    %v301 = vunpack.c.h.b16 %v200
    %v302 = vunpack.c.l.b16 %v201
    %v303 = vunpack.c.h.b16 %v201
    %v304 = vunpack.c.l.b16 %v202
    %v305 = vunpack.c.h.b16 %v202
    %v306 = vunpack.c.l.b16 %v203
    %v307 = vunpack.c.h.b16 %v203
    %v308 = vunpack.c.l.b16 %v204
    %v309 = vunpack.c.h.b16 %v204
    %v310 = vunpack.c.l.b16 %v205
    %v311 = vunpack.c.h.b16 %v205
    %v312 = vunpack.c.l.b16 %v206
    %v313 = vunpack.c.h.b16 %v206
    %v314 = vunpack.c.l.b16 %v207
    %v315 = vunpack.c.h.b16 %v207
    %v316 = vpack.c.b16 %v254, %v252
    %v317 = vpack.c.b16 %v255, %v253
    %v318 = vpack.c.b16 %v258, %v256
    %v319 = vpack.c.b16 %v259, %v257
    %v320 = vpack.c.b16 %v262, %v260
    %v321 = vpack.c.b16 %v263, %v261
    %v322 = vpack.c.b16 %v266, %v264
    %v323 = vpack.c.b16 %v267, %v265
    %v324 = vpack.c.b16 %v270, %v268
    %v325 = vpack.c.b16 %v271, %v269
    %v326 = vpack.c.b16 %v274, %v272
    %v327 = vpack.c.b16 %v275, %v273
    %v328 = vpack.c.b16 %v278, %v276
    %v329 = vpack.c.b16 %v279, %v277
    %v330 = vpack.c.b16 %v282, %v280
    %v331 = vpack.c.b16 %v283, %v281
    %v332 = vpack.c.b16 %v286, %v284
    %v333 = vpack.c.b16 %v287, %v285
    %v334 = vpack.c.b16 %v290, %v288
    %v335 = vpack.c.b16 %v291, %v289
    %v336 = vpack.c.b16 %v294, %v292
    %v337 = vpack.c.b16 %v295, %v293
    %v338 = vpack.c.b16 %v298, %v296
    %v339 = vpack.c.b16 %v299, %v297
    %v340 = vpack.c.b16 %v302, %v300
    %v341 = vpack.c.b16 %v303, %v301
    %v342 = vpack.c.b16 %v306, %v304
    %v343 = vpack.c.b16 %v307, %v305
    %v344 = vpack.c.b16 %v310, %v308
    %v345 = vpack.c.b16 %v311, %v309
    %v346 = vpack.c.b16 %v314, %v312
    %v347 = vpack.c.b16 %v315, %v313
    %380 = vmatprep.subr.bf16.mxu0 %v331
    %381 = vmatpush1.bf16.msra.mxu0 %v330
    %382 = vmatprep.subr.bf16.mxu0 %v329
    %383 = vmatpush1.bf16.msra.mxu0 %v328
    %384 = vmatprep.subr.bf16.mxu0 %v327
    %385 = vmatpush1.bf16.msra.mxu0 %v326
    %386 = vmatprep.subr.bf16.mxu0 %v325
    %387 = vmatpush1.bf16.msra.mxu0 %v324
    %388 = vmatprep.subr.bf16.mxu0 %v323
    %389 = vmatpush1.bf16.msra.mxu0 %v322
    %390 = vmatprep.subr.bf16.mxu0 %v321
    %391 = vmatpush1.bf16.msra.mxu0 %v320
    %392 = vmatprep.subr.bf16.mxu0 %v319
    %393 = vmatpush1.bf16.msra.mxu0 %v318
    %394 = vmatprep.subr.bf16.mxu0 %v317
    %395 = vmatpush1.bf16.msra.mxu0 %v316
    %396 = vmatprep.subr.bf16.mxu0 %v347
    %397 = vmatpush2.bf16.msra.mxu0 %v346
    %398 = vmatprep.subr.bf16.mxu0 %v345
    %399 = vmatpush2.bf16.msra.mxu0 %v344
    %400 = vmatprep.subr.bf16.mxu0 %v343
    %401 = vmatpush2.bf16.msra.mxu0 %v342
    %402 = vmatprep.subr.bf16.mxu0 %v341
    %403 = vmatpush2.bf16.msra.mxu0 %v340
    %404 = vmatprep.subr.bf16.mxu0 %v339
    %405 = vmatpush2.bf16.msra.mxu0 %v338
    %406 = vmatprep.subr.bf16.mxu0 %v337
    %407 = vmatpush2.bf16.msra.mxu0 %v336
    %408 = vmatprep.subr.bf16.mxu0 %v335
    %409 = vmatpush2.bf16.msra.mxu0 %v334
    %410 = vmatprep.subr.bf16.mxu0 %v333
    %411 = vmatpush2.bf16.msra.mxu0 %v332
    %412 = vmatprep.mubr.bf16.mxu0 %v175
    %413 = vmatmul.mubr.bf16.gmra.mxu0 %v174
    %v414 = vpop.f32.mrf.mxu0
    %v415 = vadd.f32 %v213, %v414
    %v416 = vpop.f32.mrf.mxu0
    %v417 = vadd.f32 %v217, %v416
    %v418 = vpop.f32.mrf.mxu0
    %v419 = vpop.f32.mrf.mxu0
    %420 = vdwg.mxu0
    %v421 = vmax.f32 %v415, 0.0
    %v422 = vmax.f32 %v417, 0.0
    %v423 = vpack.c.bf16 %v421, %v421
    %v424 = vpack.c.bf16 %v422, %v422
    %v425 = vld [vmem:[#allocation5] sm:$0xff]
    %v426 = vld [vmem:[#allocation5 + $0x8] sm:$0xff]
    %v427 = vld [vmem:[#allocation5 + $0x10] sm:$0xff]
    %v428 = vld [vmem:[#allocation5 + $0x18] sm:$0xff]
    %v429 = vld [vmem:[#allocation5 + $0x20] sm:$0xff]
    %v430 = vld [vmem:[#allocation5 + $0x28] sm:$0xff]
    %v431 = vld [vmem:[#allocation5 + $0x30] sm:$0xff]
    %v432 = vld [vmem:[#allocation5 + $0x38] sm:$0xff]
    %v433 = vld [vmem:[#allocation5 + $0x40] sm:$0xff]
    %v434 = vld [vmem:[#allocation5 + $0x48] sm:$0xff]
    %v435 = vld [vmem:[#allocation5 + $0x50] sm:$0xff]
    %v436 = vld [vmem:[#allocation5 + $0x58] sm:$0xff]
    %v437 = vld [vmem:[#allocation5 + $0x60] sm:$0xff]
    %v438 = vld [vmem:[#allocation5 + $0x68] sm:$0xff]
    %v439 = vld [vmem:[#allocation5 + $0x70] sm:$0xff]
    %v440 = vld [vmem:[#allocation5 + $0x78] sm:$0xff]
    %v441 = vld [vmem:[#allocation5 + $0x80] sm:$0xff]
    %v442 = vld [vmem:[#allocation5 + $0x88] sm:$0xff]
    %v443 = vld [vmem:[#allocation5 + $0x90] sm:$0xff]
    %v444 = vld [vmem:[#allocation5 + $0x98] sm:$0xff]
    %v445 = vld [vmem:[#allocation5 + $0xa0] sm:$0xff]
    %v446 = vld [vmem:[#allocation5 + $0xa8] sm:$0xff]
    %v447 = vld [vmem:[#allocation5 + $0xb0] sm:$0xff]
    %v448 = vld [vmem:[#allocation5 + $0xb8] sm:$0xff]
    %v449 = vld [vmem:[#allocation5 + $0xc0] sm:$0xff]
    %v450 = vld [vmem:[#allocation5 + $0xc8] sm:$0xff]
    %v451 = vld [vmem:[#allocation5 + $0xd0] sm:$0xff]
    %v452 = vld [vmem:[#allocation5 + $0xd8] sm:$0xff]
    %v453 = vld [vmem:[#allocation5 + $0xe0] sm:$0xff]
    %v454 = vld [vmem:[#allocation5 + $0xe8] sm:$0xff]
    %v455 = vld [vmem:[#allocation5 + $0xf0] sm:$0xff]
    %v456 = vld [vmem:[#allocation5 + $0xf8] sm:$0xff]
    %v457 = vld [vmem:[%s6] sm:$0x3]
    %v459 = vlaneseq
    %v460 = vshrl.u32 %v459, 7
    %v461 = vsub.s32 0, %v460
    %v462 = vrot.slane %v457, %v461
    %v463 = vlaneseq
    %v464 = vshrl.u32 %v463, 7
    %v465 = vsub.s32 1, %v464
    %v466 = vrot.slane %v457, %v465
    %v501 = vunpack.c.l.b16 %v425
    %v502 = vunpack.c.h.b16 %v425
    %v503 = vunpack.c.l.b16 %v426
    %v504 = vunpack.c.h.b16 %v426
    %v505 = vunpack.c.l.b16 %v427
    %v506 = vunpack.c.h.b16 %v427
    %v507 = vunpack.c.l.b16 %v428
    %v508 = vunpack.c.h.b16 %v428
    %v509 = vunpack.c.l.b16 %v429
    %v510 = vunpack.c.h.b16 %v429
    %v511 = vunpack.c.l.b16 %v430
    %v512 = vunpack.c.h.b16 %v430
    %v513 = vunpack.c.l.b16 %v431
    %v514 = vunpack.c.h.b16 %v431
    %v515 = vunpack.c.l.b16 %v432
    %v516 = vunpack.c.h.b16 %v432
    %v517 = vunpack.c.l.b16 %v433
    %v518 = vunpack.c.h.b16 %v433
    %v519 = vunpack.c.l.b16 %v434
    %v520 = vunpack.c.h.b16 %v434
    %v521 = vunpack.c.l.b16 %v435
    %v522 = vunpack.c.h.b16 %v435
    %v523 = vunpack.c.l.b16 %v436
    %v524 = vunpack.c.h.b16 %v436
    %v525 = vunpack.c.l.b16 %v437
    %v526 = vunpack.c.h.b16 %v437
    %v527 = vunpack.c.l.b16 %v438
    %v528 = vunpack.c.h.b16 %v438
    %v529 = vunpack.c.l.b16 %v439
    %v530 = vunpack.c.h.b16 %v439
    %v531 = vunpack.c.l.b16 %v440
    %v532 = vunpack.c.h.b16 %v440
    %v533 = vunpack.c.l.b16 %v441
    %v534 = vunpack.c.h.b16 %v441
    %v535 = vunpack.c.l.b16 %v442
    %v536 = vunpack.c.h.b16 %v442
    %v537 = vunpack.c.l.b16 %v443
    %v538 = vunpack.c.h.b16 %v443
    %v539 = vunpack.c.l.b16 %v444
    %v540 = vunpack.c.h.b16 %v444
    %v541 = vunpack.c.l.b16 %v445
    %v542 = vunpack.c.h.b16 %v445
    %v543 = vunpack.c.l.b16 %v446
    %v544 = vunpack.c.h.b16 %v446
    %v545 = vunpack.c.l.b16 %v447
    %v546 = vunpack.c.h.b16 %v447
    %v547 = vunpack.c.l.b16 %v448
    %v548 = vunpack.c.h.b16 %v448
    %v549 = vunpack.c.l.b16 %v449
    %v550 = vunpack.c.h.b16 %v449
    %v551 = vunpack.c.l.b16 %v450
    %v552 = vunpack.c.h.b16 %v450
    %v553 = vunpack.c.l.b16 %v451
    %v554 = vunpack.c.h.b16 %v451
    %v555 = vunpack.c.l.b16 %v452
    %v556 = vunpack.c.h.b16 %v452
    %v557 = vunpack.c.l.b16 %v453
    %v558 = vunpack.c.h.b16 %v453
    %v559 = vunpack.c.l.b16 %v454
    %v560 = vunpack.c.h.b16 %v454
    %v561 = vunpack.c.l.b16 %v455
    %v562 = vunpack.c.h.b16 %v455
    %v563 = vunpack.c.l.b16 %v456
    %v564 = vunpack.c.h.b16 %v456
    %v565 = vpack.c.b16 %v503, %v501
    %v566 = vpack.c.b16 %v504, %v502
    %v567 = vpack.c.b16 %v507, %v505
    %v568 = vpack.c.b16 %v508, %v506
    %v569 = vpack.c.b16 %v511, %v509
    %v570 = vpack.c.b16 %v512, %v510
    %v571 = vpack.c.b16 %v515, %v513
    %v572 = vpack.c.b16 %v516, %v514
    %v573 = vpack.c.b16 %v519, %v517
    %v574 = vpack.c.b16 %v520, %v518
    %v575 = vpack.c.b16 %v523, %v521
    %v576 = vpack.c.b16 %v524, %v522
    %v577 = vpack.c.b16 %v527, %v525
    %v578 = vpack.c.b16 %v528, %v526
    %v579 = vpack.c.b16 %v531, %v529
    %v580 = vpack.c.b16 %v532, %v530
    %v581 = vpack.c.b16 %v535, %v533
    %v582 = vpack.c.b16 %v536, %v534
    %v583 = vpack.c.b16 %v539, %v537
    %v584 = vpack.c.b16 %v540, %v538
    %v585 = vpack.c.b16 %v543, %v541
    %v586 = vpack.c.b16 %v544, %v542
    %v587 = vpack.c.b16 %v547, %v545
    %v588 = vpack.c.b16 %v548, %v546
    %v589 = vpack.c.b16 %v551, %v549
    %v590 = vpack.c.b16 %v552, %v550
    %v591 = vpack.c.b16 %v555, %v553
    %v592 = vpack.c.b16 %v556, %v554
    %v593 = vpack.c.b16 %v559, %v557
    %v594 = vpack.c.b16 %v560, %v558
    %v595 = vpack.c.b16 %v563, %v561
    %v596 = vpack.c.b16 %v564, %v562
    %629 = vmatprep.subr.bf16.mxu0 %v580
    %630 = vmatpush1.bf16.msra.mxu0 %v579
    %631 = vmatprep.subr.bf16.mxu0 %v578
    %632 = vmatpush1.bf16.msra.mxu0 %v577
    %633 = vmatprep.subr.bf16.mxu0 %v576
    %634 = vmatpush1.bf16.msra.mxu0 %v575
    %635 = vmatprep.subr.bf16.mxu0 %v574
    %636 = vmatpush1.bf16.msra.mxu0 %v573
    %637 = vmatprep.subr.bf16.mxu0 %v572
    %638 = vmatpush1.bf16.msra.mxu0 %v571
    %639 = vmatprep.subr.bf16.mxu0 %v570
    %640 = vmatpush1.bf16.msra.mxu0 %v569
    %641 = vmatprep.subr.bf16.mxu0 %v568
    %642 = vmatpush1.bf16.msra.mxu0 %v567
    %643 = vmatprep.subr.bf16.mxu0 %v566
    %644 = vmatpush1.bf16.msra.mxu0 %v565
    %645 = vmatprep.subr.bf16.mxu0 %v596
    %646 = vmatpush2.bf16.msra.mxu0 %v595
    %647 = vmatprep.subr.bf16.mxu0 %v594
    %648 = vmatpush2.bf16.msra.mxu0 %v593
    %649 = vmatprep.subr.bf16.mxu0 %v592
    %650 = vmatpush2.bf16.msra.mxu0 %v591
    %651 = vmatprep.subr.bf16.mxu0 %v590
    %652 = vmatpush2.bf16.msra.mxu0 %v589
    %653 = vmatprep.subr.bf16.mxu0 %v588
    %654 = vmatpush2.bf16.msra.mxu0 %v587
    %655 = vmatprep.subr.bf16.mxu0 %v586
    %656 = vmatpush2.bf16.msra.mxu0 %v585
    %657 = vmatprep.subr.bf16.mxu0 %v584
    %658 = vmatpush2.bf16.msra.mxu0 %v583
    %659 = vmatprep.subr.bf16.mxu0 %v582
    %660 = vmatpush2.bf16.msra.mxu0 %v581
    %661 = vmatprep.mubr.bf16.mxu0 %v424
    %662 = vmatmul.mubr.bf16.gmra.mxu0 %v423
    %v663 = vpop.f32.mrf.mxu0
    %v664 = vadd.f32 %v462, %v663
    %v665 = vpop.f32.mrf.mxu0
    %v666 = vadd.f32 %v466, %v665
    %v667 = vpop.f32.mrf.mxu0
    %v668 = vpop.f32.mrf.mxu0
    %669 = vdwg.mxu0
    %v670 = vmax.f32 %v664, 0.0
    %v671 = vmax.f32 %v666, 0.0
    %v672 = vpack.c.bf16 %v670, %v670
    %v673 = vpack.c.bf16 %v671, %v671
    %v674 = vld [vmem:[#allocation7] sm:$0xf]
    %v675 = vld [vmem:[#allocation7 + $0x4] sm:$0xf]
    %v676 = vld [vmem:[#allocation7 + $0x8] sm:$0xf]
    %v677 = vld [vmem:[#allocation7 + $0xc] sm:$0xf]
    %v678 = vld [vmem:[#allocation7 + $0x10] sm:$0xf]
    %v679 = vld [vmem:[#allocation7 + $0x14] sm:$0xf]
    %v680 = vld [vmem:[#allocation7 + $0x18] sm:$0xf]
    %v681 = vld [vmem:[#allocation7 + $0x1c] sm:$0xf]
    %v682 = vld [vmem:[#allocation7 + $0x20] sm:$0xf]
    %v683 = vld [vmem:[#allocation7 + $0x24] sm:$0xf]
    %v684 = vld [vmem:[#allocation7 + $0x28] sm:$0xf]
    %v685 = vld [vmem:[#allocation7 + $0x2c] sm:$0xf]
    %v686 = vld [vmem:[#allocation7 + $0x30] sm:$0xf]
    %v687 = vld [vmem:[#allocation7 + $0x34] sm:$0xf]
    %v688 = vld [vmem:[#allocation7 + $0x38] sm:$0xf]
    %v689 = vld [vmem:[#allocation7 + $0x3c] sm:$0xf]
    %v690 = vld [vmem:[#allocation7 + $0x40] sm:$0xf]
    %v691 = vld [vmem:[#allocation7 + $0x44] sm:$0xf]
    %v692 = vld [vmem:[#allocation7 + $0x48] sm:$0xf]
    %v693 = vld [vmem:[#allocation7 + $0x4c] sm:$0xf]
    %v694 = vld [vmem:[#allocation7 + $0x50] sm:$0xf]
    %v695 = vld [vmem:[#allocation7 + $0x54] sm:$0xf]
    %v696 = vld [vmem:[#allocation7 + $0x58] sm:$0xf]
    %v697 = vld [vmem:[#allocation7 + $0x5c] sm:$0xf]
    %v698 = vld [vmem:[#allocation7 + $0x60] sm:$0xf]
    %v699 = vld [vmem:[#allocation7 + $0x64] sm:$0xf]
    %v700 = vld [vmem:[#allocation7 + $0x68] sm:$0xf]
    %v701 = vld [vmem:[#allocation7 + $0x6c] sm:$0xf]
    %v702 = vld [vmem:[#allocation7 + $0x70] sm:$0xf]
    %v703 = vld [vmem:[#allocation7 + $0x74] sm:$0xf]
    %v704 = vld [vmem:[#allocation7 + $0x78] sm:$0xf]
    %v705 = vld [vmem:[#allocation7 + $0x7c] sm:$0xf]
    %v706 = vld [vmem:[%s8] sm:$0x1]
    %v708 = vlaneseq
    %v709 = vshrl.u32 %v708, 7
    %v710 = vsub.s32 0, %v709
    %v711 = vrot.slane %v706, %v710
    %v745 = vunpack.c.l.b16 %v674
    %v746 = vunpack.c.l.b16 %v675
    %v747 = vunpack.c.l.b16 %v676
    %v748 = vunpack.c.l.b16 %v677
    %v749 = vunpack.c.l.b16 %v678
    %v750 = vunpack.c.l.b16 %v679
    %v751 = vunpack.c.l.b16 %v680
    %v752 = vunpack.c.l.b16 %v681
    %v753 = vunpack.c.l.b16 %v682
    %v754 = vunpack.c.l.b16 %v683
    %v755 = vunpack.c.l.b16 %v684
    %v756 = vunpack.c.l.b16 %v685
    %v757 = vunpack.c.l.b16 %v686
    %v758 = vunpack.c.l.b16 %v687
    %v759 = vunpack.c.l.b16 %v688
    %v760 = vunpack.c.l.b16 %v689
    %v761 = vunpack.c.l.b16 %v690
    %v762 = vunpack.c.l.b16 %v691
    %v763 = vunpack.c.l.b16 %v692
    %v764 = vunpack.c.l.b16 %v693
    %v765 = vunpack.c.l.b16 %v694
    %v766 = vunpack.c.l.b16 %v695
    %v767 = vunpack.c.l.b16 %v696
    %v768 = vunpack.c.l.b16 %v697
    %v769 = vunpack.c.l.b16 %v698
    %v770 = vunpack.c.l.b16 %v699
    %v771 = vunpack.c.l.b16 %v700
    %v772 = vunpack.c.l.b16 %v701
    %v773 = vunpack.c.l.b16 %v702
    %v774 = vunpack.c.l.b16 %v703
    %v775 = vunpack.c.l.b16 %v704
    %v776 = vunpack.c.l.b16 %v705
    %v777 = vpack.c.b16 %v746, %v745
    %v778 = vpack.c.b16 %v748, %v747
    %v779 = vpack.c.b16 %v750, %v749
    %v780 = vpack.c.b16 %v752, %v751
    %v781 = vpack.c.b16 %v754, %v753
    %v782 = vpack.c.b16 %v756, %v755
    %v783 = vpack.c.b16 %v758, %v757
    %v784 = vpack.c.b16 %v760, %v759
    %v785 = vpack.c.b16 %v762, %v761
    %v786 = vpack.c.b16 %v764, %v763
    %v787 = vpack.c.b16 %v766, %v765
    %v788 = vpack.c.b16 %v768, %v767
    %v789 = vpack.c.b16 %v770, %v769
    %v790 = vpack.c.b16 %v772, %v771
    %v791 = vpack.c.b16 %v774, %v773
    %v792 = vpack.c.b16 %v776, %v775
    %809 = vmatprep.subr.bf16.mxu0 0
    %810 = vmatpush1.bf16.msra.mxu0 %v784
    %811 = vmatprep.subr.bf16.mxu0 0
    %812 = vmatpush1.bf16.msra.mxu0 %v783
    %813 = vmatprep.subr.bf16.mxu0 0
    %814 = vmatpush1.bf16.msra.mxu0 %v782
    %815 = vmatprep.subr.bf16.mxu0 0
    %816 = vmatpush1.bf16.msra.mxu0 %v781
    %817 = vmatprep.subr.bf16.mxu0 0
    %818 = vmatpush1.bf16.msra.mxu0 %v780
    %819 = vmatprep.subr.bf16.mxu0 0
    %820 = vmatpush1.bf16.msra.mxu0 %v779
    %821 = vmatprep.subr.bf16.mxu0 0
    %822 = vmatpush1.bf16.msra.mxu0 %v778
    %823 = vmatprep.subr.bf16.mxu0 0
    %824 = vmatpush1.bf16.msra.mxu0 %v777
    %825 = vmatprep.subr.bf16.mxu0 0
    %826 = vmatpush2.bf16.msra.mxu0 %v792
    %827 = vmatprep.subr.bf16.mxu0 0
    %828 = vmatpush2.bf16.msra.mxu0 %v791
    %829 = vmatprep.subr.bf16.mxu0 0
    %830 = vmatpush2.bf16.msra.mxu0 %v790
    %831 = vmatprep.subr.bf16.mxu0 0
    %832 = vmatpush2.bf16.msra.mxu0 %v789
    %833 = vmatprep.subr.bf16.mxu0 0
    %834 = vmatpush2.bf16.msra.mxu0 %v788
    %835 = vmatprep.subr.bf16.mxu0 0
    %836 = vmatpush2.bf16.msra.mxu0 %v787
    %837 = vmatprep.subr.bf16.mxu0 0
    %838 = vmatpush2.bf16.msra.mxu0 %v786
    %839 = vmatprep.subr.bf16.mxu0 0
    %840 = vmatpush2.bf16.msra.mxu0 %v785
    %841 = vmatprep.mubr.bf16.mxu0 %v673
    %842 = vmatmul.mubr.bf16.gmra.mxu0 %v672
    %v843 = vpop.f32.mrf.mxu0
    %v844 = vadd.f32 %v711, %v843
    %v845 = vpop.f32.mrf.mxu0
    %v846 = vpop.f32.mrf.mxu0
    %v847 = vpop.f32.mrf.mxu0
    %848 = vdwg.mxu0
    %849 = vst [vmem:[#allocation8] sm:$0xff] %v844
    // Predicated region
    $region50: #{tpu_custom_call.1} parent=1 // pred_check
      _
    $region51: #{tpu_custom_call.1} parent=1 // pred_check_branch
      %851 = sbr.rel (0) target = $region53
    $region52: #{tpu_custom_call.1} parent=1 // pred_region
      %s853 = ssub.s32 128, 128
      %854 = vsyncadd [#allocation4], %s853
      %s856 = sshll.u32 [#allocation8], 4
      %s857 = int_to_ptr.vmem [resolvable:$true] %s856
      %859 = dma.vmem_to_hbm [thread:$0]  %s857, 128, %s9, [#allocation4]
    $region53: #{tpu_custom_call.1} parent=1 // pred_fallthru
      _
    // Predicated region
    $region54: #{tpu_custom_call.1} parent=1 // pred_check
      _
    $region55: #{tpu_custom_call.1} parent=1 // pred_check_branch
      %861 = sbr.rel (0) target = $region57
    $region56: #{tpu_custom_call.1} parent=1 // pred_region
      %862 = dma.done [#allocation4], 128
    $region57: #{tpu_custom_call.1} parent=1 // pred_fallthru
      _
    %863 = vsyncpa [#allocation3], 1
    %864 = vsyncpa [#allocation6], 1
    %865 = vsyncpa [#allocation4], 1

</llo_original>
